<compile_context>
chip_gen: v7x
topology: tpu7x:2x2x1
jax: 0.10.0
libtpu: 0.0.40
codegen_flags: <defaults>
</compile_context>

<pallas_src>
import functools
import math

import jax
import jax.numpy as jnp
from jax.experimental import pallas as pl
from jax.experimental.pallas import tpu as pltpu


def _round_up(x, m):
    return ((x + m - 1) // m) * m


def _snr_loss_kernel(x_ref, y_ref, out_ref,
                     sx_ref, sy_ref, syy_ref, srr_ref,
                     *, zero_mean, eps, n_time):
    """Grid = (row_tiles, time_tiles); time axis is the reduction axis.

    x_ref/y_ref: (TR, TT) tiles in VMEM (native dtype, upcast here).
    out_ref:     (TR, 1) f32 per-row negated losses (written on last T step).
    s*_ref:      (TR, 1) f32 VMEM accumulators (persist across T steps).
    """
    k = pl.program_id(1)
    n_k = pl.num_programs(1)

    @pl.when(k == 0)
    def _init():
        sx_ref[...] = jnp.zeros_like(sx_ref)
        sy_ref[...] = jnp.zeros_like(sy_ref)
        syy_ref[...] = jnp.zeros_like(syy_ref)
        srr_ref[...] = jnp.zeros_like(srr_ref)

    x = x_ref[...].astype(jnp.float32)
    y = y_ref[...].astype(jnp.float32)
    res = x - y

    if zero_mean:
        sx_ref[...] += jnp.sum(x, axis=-1, keepdims=True)
        sy_ref[...] += jnp.sum(y, axis=-1, keepdims=True)
    syy_ref[...] += jnp.sum(y * y, axis=-1, keepdims=True)
    srr_ref[...] += jnp.sum(res * res, axis=-1, keepdims=True)

    @pl.when(k == n_k - 1)
    def _finalize():
        syy = syy_ref[...]
        srr = srr_ref[...]
        if zero_mean:
            t_f = jnp.float32(n_time)
            inv_t = jnp.float32(1.0 / n_time)
            mx = sx_ref[...] * inv_t
            my = sy_ref[...] * inv_t
            dm = mx - my
            target_energy = syy - t_f * my * my
            res_energy = srr - t_f * dm * dm
        else:
            target_energy = syy
            res_energy = srr
        # Preserve the double-eps of the reference exactly.
        losses = 10.0 * jnp.log10(target_energy / (res_energy + eps) + eps)
        out_ref[...] = -losses


def snr_loss(input_x, target_y, *, zero_mean=True, eps=1e-8, reduction="mean"):
    """Pallas TPU implementation of auraloss SNRLoss.forward."""
    assert input_x.shape == target_y.shape
    lead = input_x.shape[:-1]
    T = input_x.shape[-1]
    R = int(math.prod(lead)) if lead else 1

    x2d = input_x.reshape(R, T)   # native dtype; upcast happens in-kernel
    y2d = target_y.reshape(R, T)

    # Tile sizes: multiples of (8, 128), sized well under scoped VMEM on
    # v5e/v6e/v7x (2 inputs x 2 pipeline buffers x TR*TT*4B <= ~16 MiB).
    TR = min(_round_up(R, 8), 512)
    TT = min(_round_up(T, 128), 2048)
    R_pad = _round_up(R, TR)
    T_pad = _round_up(T, TT)
    if (R_pad, T_pad) != (R, T):
        # Zero padding is exact for the one-pass formulation (padded samples
        # contribute nothing to the raw sums; true T is used as divisor).
        x2d = jnp.pad(x2d, ((0, R_pad - R), (0, T_pad - T)))
        y2d = jnp.pad(y2d, ((0, R_pad - R), (0, T_pad - T)))

    grid = (R_pad // TR, T_pad // TT)

    kernel = functools.partial(
        _snr_loss_kernel, zero_mean=zero_mean, eps=float(eps), n_time=T)

    neg_losses = pl.pallas_call(
        kernel,
        out_shape=jax.ShapeDtypeStruct((R_pad, 1), jnp.float32),
        grid_spec=pltpu.PrefetchScalarGridSpec(
            num_scalar_prefetch=0,
            grid=grid,
            in_specs=[
                pl.BlockSpec((TR, TT), lambda i, k: (i, k)),
                pl.BlockSpec((TR, TT), lambda i, k: (i, k)),
            ],
            out_specs=pl.BlockSpec((TR, 1), lambda i, k: (i, 0)),
            scratch_shapes=[pltpu.VMEM((TR, 1), jnp.float32)] * 4,
        ),
        compiler_params=pltpu.CompilerParams(
            dimension_semantics=("parallel", "arbitrary"),
            vmem_limit_bytes=48 * 1024 * 1024,
        ),
    )(x2d, y2d)

    neg_losses = neg_losses[:R, 0]          # drop padded rows
    if reduction == "mean":
        return jnp.mean(neg_losses)
    elif reduction == "sum":
        return jnp.sum(neg_losses)
    elif reduction == "none":
        return neg_losses.reshape(lead)
    else:
        raise ValueError(f"unknown reduction: {reduction!r}")


def snr_loss_ref(input_x, target_y, *, zero_mean=True, eps=1e-8,
                 reduction="mean"):
    """Pure-JAX reference mirroring the PyTorch forward."""
    x = input_x.astype(jnp.float32)
    y = target_y.astype(jnp.float32)
    if zero_mean:
        x = x - jnp.mean(x, axis=-1, keepdims=True)
        y = y - jnp.mean(y, axis=-1, keepdims=True)
    res = x - y
    losses = 10.0 * jnp.log10(
        jnp.sum(y ** 2, axis=-1) / (jnp.sum(res ** 2, axis=-1) + eps) + eps)
    if reduction == "mean":
        losses = jnp.mean(losses)
    elif reduction == "sum":
        losses = jnp.sum(losses)
    return -losses


if __name__ == "__main__":
    key = jax.random.PRNGKey(0)

    def make(shape, k):
        k1, k2 = jax.random.split(k)
        target = jax.random.normal(k1, shape, dtype=jnp.float32)
        noise = 0.1 * jax.random.normal(k2, shape, dtype=jnp.float32)
        return target + noise, target

    ok = True

    # Case 1: small, aligned shapes (B=2, C=4, T=128).
    k, key = jax.random.split(key)
    inp, tgt = make((2, 4, 128), k)
    out = jax.block_until_ready(snr_loss(inp, tgt))
    ref = snr_loss_ref(inp, tgt)
    ok &= bool(jnp.allclose(out, ref, rtol=1e-4, atol=1e-4))

    # Case 2: unaligned T with multiple reduction (T) grid steps + padding.
    k, key = jax.random.split(key)
    inp2, tgt2 = make((2, 3, 2500), k)
    out2 = jax.block_until_ready(snr_loss(inp2, tgt2))
    ref2 = snr_loss_ref(inp2, tgt2)
    ok &= bool(jnp.allclose(out2, ref2, rtol=1e-4, atol=1e-4))

    # Case 3: zero_mean=False, sum reduction.
    out3 = jax.block_until_ready(
        snr_loss(inp, tgt, zero_mean=False, reduction="sum"))
    ref3 = snr_loss_ref(inp, tgt, zero_mean=False, reduction="sum")
    ok &= bool(jnp.allclose(out3, ref3, rtol=1e-4, atol=1e-4))

    assert ok, (out, ref, out2, ref2, out3, ref3)
    print("KERNEL_OK")
</pallas_src>

<mosaic_0001>
module attributes {stable_mosaic.version = 11 : i64} {
  func.func @_snr_loss_kernel(%arg0: i32, %arg1: i32, %arg2: memref<8x128xf32, #tpu.memory_space<vmem>>, %arg3: memref<8x128xf32, #tpu.memory_space<vmem>>, %arg4: memref<8x1xf32, #tpu.memory_space<vmem>>, %arg5: memref<8x1xf32, #tpu.memory_space<vmem>>, %arg6: memref<8x1xf32, #tpu.memory_space<vmem>>, %arg7: memref<8x1xf32, #tpu.memory_space<vmem>>, %arg8: memref<8x1xf32, #tpu.memory_space<vmem>>) attributes {dimension_semantics = [#tpu.dimension_semantics<parallel>, #tpu.dimension_semantics<arbitrary>], iteration_bounds = array<i64: 1, 1>, scalar_prefetch = 0 : i64, scratch_operands = 4 : i64, tpu.core_type = #tpu.core_type<tc>, window_params = [{transform_indices = @transform_0, window_bounds = array<i64: 8, 128>}, {transform_indices = @transform_1, window_bounds = array<i64: 8, 128>}, {transform_indices = @transform_2, window_bounds = array<i64: 8, 1>}]} {
    %c0_i32 = arith.constant 0 : i32
    %0 = arith.cmpi eq, %arg1, %c0_i32 : i32
    %1 = arith.extui %0 : i1 to i32
    %c0_i32_0 = arith.constant 0 : i32
    %2 = arith.cmpi ne, %1, %c0_i32_0 : i32
    scf.if %2 {
      %cst_25 = arith.constant 0.000000e+00 : f32
      %31 = vector.broadcast %cst_25 : f32 to vector<8x1xf32>
      %c0_26 = arith.constant 0 : index
      %c0_27 = arith.constant 0 : index
      %32 = vector.load %arg5[%c0_26, %c0_27] : memref<8x1xf32, #tpu.memory_space<vmem>>, vector<8x1xf32>
      tpu.vector_store %arg5[%c0_26, %c0_27], %31 {strides = array<i32>} : memref<8x1xf32, #tpu.memory_space<vmem>>, vector<8x1xf32>,
      %cst_28 = arith.constant 0.000000e+00 : f32
      %33 = vector.broadcast %cst_28 : f32 to vector<8x1xf32>
      %c0_29 = arith.constant 0 : index
      %c0_30 = arith.constant 0 : index
      %34 = vector.load %arg6[%c0_29, %c0_30] : memref<8x1xf32, #tpu.memory_space<vmem>>, vector<8x1xf32>
      tpu.vector_store %arg6[%c0_29, %c0_30], %33 {strides = array<i32>} : memref<8x1xf32, #tpu.memory_space<vmem>>, vector<8x1xf32>,
      %cst_31 = arith.constant 0.000000e+00 : f32
      %35 = vector.broadcast %cst_31 : f32 to vector<8x1xf32>
      %c0_32 = arith.constant 0 : index
      %c0_33 = arith.constant 0 : index
      %36 = vector.load %arg7[%c0_32, %c0_33] : memref<8x1xf32, #tpu.memory_space<vmem>>, vector<8x1xf32>
      tpu.vector_store %arg7[%c0_32, %c0_33], %35 {strides = array<i32>} : memref<8x1xf32, #tpu.memory_space<vmem>>, vector<8x1xf32>,
      %cst_34 = arith.constant 0.000000e+00 : f32
      %37 = vector.broadcast %cst_34 : f32 to vector<8x1xf32>
      %c0_35 = arith.constant 0 : index
      %c0_36 = arith.constant 0 : index
      %38 = vector.load %arg8[%c0_35, %c0_36] : memref<8x1xf32, #tpu.memory_space<vmem>>, vector<8x1xf32>
      tpu.vector_store %arg8[%c0_35, %c0_36], %37 {strides = array<i32>} : memref<8x1xf32, #tpu.memory_space<vmem>>, vector<8x1xf32>,
    } else {
    }
    %c0 = arith.constant 0 : index
    %c0_1 = arith.constant 0 : index
    %3 = vector.load %arg2[%c0, %c0_1] : memref<8x128xf32, #tpu.memory_space<vmem>>, vector<8x128xf32>
    %c0_2 = arith.constant 0 : index
    %c0_3 = arith.constant 0 : index
    %4 = vector.load %arg3[%c0_2, %c0_3] : memref<8x128xf32, #tpu.memory_space<vmem>>, vector<8x128xf32>
    %5 = arith.subf %3, %4 : vector<8x128xf32>
    %c0_4 = arith.constant 0 : index
    %c0_5 = arith.constant 0 : index
    %6 = vector.load %arg5[%c0_4, %c0_5] : memref<8x1xf32, #tpu.memory_space<vmem>>, vector<8x1xf32>
    %cst = arith.constant dense<0.000000e+00> : vector<8xf32>
    %7 = vector.multi_reduction <add>, %3, %cst [1] : vector<8x128xf32> to vector<8xf32>
    %8 = vector.shape_cast %7 : vector<8xf32> to vector<8x1xf32>
    %9 = arith.addf %6, %8 : vector<8x1xf32>
    %c0_6 = arith.constant 0 : index
    %c0_7 = arith.constant 0 : index
    %10 = vector.load %arg5[%c0_6, %c0_7] : memref<8x1xf32, #tpu.memory_space<vmem>>, vector<8x1xf32>
    tpu.vector_store %arg5[%c0_6, %c0_7], %9 {strides = array<i32>} : memref<8x1xf32, #tpu.memory_space<vmem>>, vector<8x1xf32>,
    %c0_8 = arith.constant 0 : index
    %c0_9 = arith.constant 0 : index
    %11 = vector.load %arg6[%c0_8, %c0_9] : memref<8x1xf32, #tpu.memory_space<vmem>>, vector<8x1xf32>
    %cst_10 = arith.constant dense<0.000000e+00> : vector<8xf32>
    %12 = vector.multi_reduction <add>, %4, %cst_10 [1] : vector<8x128xf32> to vector<8xf32>
    %13 = vector.shape_cast %12 : vector<8xf32> to vector<8x1xf32>
    %14 = arith.addf %11, %13 : vector<8x1xf32>
    %c0_11 = arith.constant 0 : index
    %c0_12 = arith.constant 0 : index
    %15 = vector.load %arg6[%c0_11, %c0_12] : memref<8x1xf32, #tpu.memory_space<vmem>>, vector<8x1xf32>
    tpu.vector_store %arg6[%c0_11, %c0_12], %14 {strides = array<i32>} : memref<8x1xf32, #tpu.memory_space<vmem>>, vector<8x1xf32>,
    %c0_13 = arith.constant 0 : index
    %c0_14 = arith.constant 0 : index
    %16 = vector.load %arg7[%c0_13, %c0_14] : memref<8x1xf32, #tpu.memory_space<vmem>>, vector<8x1xf32>
    %17 = arith.mulf %4, %4 : vector<8x128xf32>
    %cst_15 = arith.constant dense<0.000000e+00> : vector<8xf32>
    %18 = vector.multi_reduction <add>, %17, %cst_15 [1] : vector<8x128xf32> to vector<8xf32>
    %19 = vector.shape_cast %18 : vector<8xf32> to vector<8x1xf32>
    %20 = arith.addf %16, %19 : vector<8x1xf32>
    %c0_16 = arith.constant 0 : index
    %c0_17 = arith.constant 0 : index
    %21 = vector.load %arg7[%c0_16, %c0_17] : memref<8x1xf32, #tpu.memory_space<vmem>>, vector<8x1xf32>
    tpu.vector_store %arg7[%c0_16, %c0_17], %20 {strides = array<i32>} : memref<8x1xf32, #tpu.memory_space<vmem>>, vector<8x1xf32>,
    %c0_18 = arith.constant 0 : index
    %c0_19 = arith.constant 0 : index
    %22 = vector.load %arg8[%c0_18, %c0_19] : memref<8x1xf32, #tpu.memory_space<vmem>>, vector<8x1xf32>
    %23 = arith.mulf %5, %5 : vector<8x128xf32>
    %cst_20 = arith.constant dense<0.000000e+00> : vector<8xf32>
    %24 = vector.multi_reduction <add>, %23, %cst_20 [1] : vector<8x128xf32> to vector<8xf32>
    %25 = vector.shape_cast %24 : vector<8xf32> to vector<8x1xf32>
    %26 = arith.addf %22, %25 : vector<8x1xf32>
    %c0_21 = arith.constant 0 : index
    %c0_22 = arith.constant 0 : index
    %27 = vector.load %arg8[%c0_21, %c0_22] : memref<8x1xf32, #tpu.memory_space<vmem>>, vector<8x1xf32>
    tpu.vector_store %arg8[%c0_21, %c0_22], %26 {strides = array<i32>} : memref<8x1xf32, #tpu.memory_space<vmem>>, vector<8x1xf32>,
    %c0_i32_23 = arith.constant 0 : i32
    %28 = arith.cmpi eq, %arg1, %c0_i32_23 : i32
    %29 = arith.extui %28 : i1 to i32
    %c0_i32_24 = arith.constant 0 : i32
    %30 = arith.cmpi ne, %29, %c0_i32_24 : i32
    scf.if %30 {
      %c0_25 = arith.constant 0 : index
      %c0_26 = arith.constant 0 : index
      %31 = vector.load %arg7[%c0_25, %c0_26] : memref<8x1xf32, #tpu.memory_space<vmem>>, vector<8x1xf32>
      %c0_27 = arith.constant 0 : index
      %c0_28 = arith.constant 0 : index
      %32 = vector.load %arg8[%c0_27, %c0_28] : memref<8x1xf32, #tpu.memory_space<vmem>>, vector<8x1xf32>
      %c0_29 = arith.constant 0 : index
      %c0_30 = arith.constant 0 : index
      %33 = vector.load %arg5[%c0_29, %c0_30] : memref<8x1xf32, #tpu.memory_space<vmem>>, vector<8x1xf32>
      %cst_31 = arith.constant 7.812500e-03 : f32
      %34 = vector.broadcast %cst_31 : f32 to vector<8x1xf32>
      %35 = arith.mulf %33, %34 : vector<8x1xf32>
      %c0_32 = arith.constant 0 : index
      %c0_33 = arith.constant 0 : index
      %36 = vector.load %arg6[%c0_32, %c0_33] : memref<8x1xf32, #tpu.memory_space<vmem>>, vector<8x1xf32>
      %cst_34 = arith.constant 7.812500e-03 : f32
      %37 = vector.broadcast %cst_34 : f32 to vector<8x1xf32>
      %38 = arith.mulf %36, %37 : vector<8x1xf32>
      %39 = arith.subf %35, %38 : vector<8x1xf32>
      %cst_35 = arith.constant 1.280000e+02 : f32
      %40 = vector.broadcast %cst_35 : f32 to vector<8x1xf32>
      %41 = arith.mulf %40, %38 : vector<8x1xf32>
      %42 = arith.mulf %41, %38 : vector<8x1xf32>
      %43 = arith.subf %31, %42 : vector<8x1xf32>
      %cst_36 = arith.constant 1.280000e+02 : f32
      %44 = vector.broadcast %cst_36 : f32 to vector<8x1xf32>
      %45 = arith.mulf %44, %39 : vector<8x1xf32>
      %46 = arith.mulf %45, %39 : vector<8x1xf32>
      %47 = arith.subf %32, %46 : vector<8x1xf32>
      %cst_37 = arith.constant 9.99999993E-9 : f32
      %48 = vector.broadcast %cst_37 : f32 to vector<8x1xf32>
      %49 = arith.addf %47, %48 : vector<8x1xf32>
      %50 = arith.divf %43, %49 : vector<8x1xf32>
      %cst_38 = arith.constant 9.99999993E-9 : f32
      %51 = vector.broadcast %cst_38 : f32 to vector<8x1xf32>
      %52 = arith.addf %50, %51 : vector<8x1xf32>
      %53 = math.log %52 : vector<8x1xf32>
      %cst_39 = arith.constant 0.434294492 : f32
      %54 = vector.broadcast %cst_39 : f32 to vector<8x1xf32>
      %55 = arith.mulf %53, %54 : vector<8x1xf32>
      %cst_40 = arith.constant 1.000000e+01 : f32
      %56 = vector.broadcast %cst_40 : f32 to vector<8x1xf32>
      %57 = arith.mulf %56, %55 : vector<8x1xf32>
      %cst_41 = arith.constant 0.000000e+00 : f32
      %58 = vector.broadcast %cst_41 : f32 to vector<8x1xf32>
      %59 = arith.subf %58, %57 : vector<8x1xf32>
      %c0_42 = arith.constant 0 : index
      %c0_43 = arith.constant 0 : index
      %60 = vector.load %arg4[%c0_42, %c0_43] : memref<8x1xf32, #tpu.memory_space<vmem>>, vector<8x1xf32>
      tpu.vector_store %arg4[%c0_42, %c0_43], %59 {strides = array<i32>} : memref<8x1xf32, #tpu.memory_space<vmem>>, vector<8x1xf32>,
    } else {
    }
    return
  }
  func.func @transform_0(%arg0: i32, %arg1: i32) -> (i32, i32) {
    %c0_i32 = arith.constant 0 : i32
    return %arg0, %arg1 : i32, i32
  }
  func.func @transform_1(%arg0: i32, %arg1: i32) -> (i32, i32) {
    %c0_i32 = arith.constant 0 : i32
    return %arg0, %arg1 : i32, i32
  }
  func.func @transform_2(%arg0: i32, %arg1: i32) -> (i32, i32) {
    %c0_i32 = arith.constant 0 : i32
    %c0_i32_0 = arith.constant 0 : i32
    return %arg0, %c0_i32 : i32, i32
  }
}

</mosaic_0001>

<llo_original>
// kernel: tpu_custom_call.1
$region0: #{tpu_custom_call.1}
  #allocation0 [shape = 'u32[]', space=smem, size = 0x4, offset = 0x4, fixed_abs, tag = 'smem constant byte address 0x4 - core index']
  #allocation1 [shape = 'u32[144,128]{1,0:T(1,128)}', space=vmem, size = 0x12000, scoped, tag = 'internal scratch']
  #allocation2 [shape = 'f32[8,1]{1,0:T(8,128)}', space=vmem, size = 0x1000, scoped, tag = 'scratch operand']
  #allocation3 [shape = 'f32[8,1]{1,0:T(8,128)}', space=vmem, size = 0x1000, scoped, tag = 'scratch operand']
  #allocation4 [shape = 'f32[8,1]{1,0:T(8,128)}', space=vmem, size = 0x1000, scoped, tag = 'scratch operand']
  #allocation5 [shape = 'f32[8,1]{1,0:T(8,128)}', space=vmem, size = 0x1000, scoped, tag = 'scratch operand']
  %s0 = inlined_call_operand.hbm [shape: f32[8,128], index: 0, kind: input, shape index: {}]
  %s1 = inlined_call_operand.hbm [shape: f32[8,128], index: 1, kind: input, shape index: {}]
  %s2 = inlined_call_operand.vmem [shape: f32[8,1], index: 2, kind: output, shape index: {}]
  %s3 = sld [smem:[#allocation0]]
  $region34: #{tpu_custom_call.1} parent=0
    _
  %s5 = ssub.s32 1, %s3
  %s6 = scalar_select 0, %s5, %s3
  $region1: #{tpu_custom_call.1} parent=0
    #allocation6 [shape = 'u8[4096]{0}', space=vmem, size = 0x1000, scoped, tag = 'input window, operand 0, single buffered']
    #allocation7 [shape = 's32[1]{0}', space=sflag, size = 0x4, scoped, tag = 'scoped memory for tpu_custom_call.1']
    #allocation8 [shape = 'u8[4096]{0}', space=vmem, size = 0x1000, scoped, tag = 'input window, operand 1, single buffered']
    #allocation9 [shape = 's32[1]{0}', space=sflag, size = 0x4, scoped, tag = 'scoped memory for tpu_custom_call.1']
    %7 = vsyncpa [#allocation7], 0
    %8 = vsyncpa [#allocation9], 0
    // Predicated region
    $region2: #{tpu_custom_call.1} parent=1 // pred_check
      _
    $region3: #{tpu_custom_call.1} parent=1 // pred_check_branch
      %10 = sbr.rel (0) target = $region5
    $region4: #{tpu_custom_call.1} parent=1 // pred_region
      %s12 = ssub.s32 128, 128
      %13 = vsyncadd [#allocation7], %s12
      %s15 = sshll.u32 [#allocation6], 4
      %s16 = int_to_ptr.vmem [resolvable:$true] %s15
      %18 = dma.hbm_to_vmem [thread:$0]  %s0, 128, %s16, [#allocation7]
    $region5: #{tpu_custom_call.1} parent=1 // pred_fallthru
      _
    // Predicated region
    $region6: #{tpu_custom_call.1} parent=1 // pred_check
      _
    $region7: #{tpu_custom_call.1} parent=1 // pred_check_branch
      %20 = sbr.rel (0) target = $region9
    $region8: #{tpu_custom_call.1} parent=1 // pred_region
      %s22 = ssub.s32 128, 128
      %23 = vsyncadd [#allocation9], %s22
      %s25 = sshll.u32 [#allocation8], 4
      %s26 = int_to_ptr.vmem [resolvable:$true] %s25
      %28 = dma.hbm_to_vmem [thread:$0]  %s1, 128, %s26, [#allocation9]
    $region9: #{tpu_custom_call.1} parent=1 // pred_fallthru
      _
    // Predicated region
    $region10: #{tpu_custom_call.1} parent=1 // pred_check
      _
    $region11: #{tpu_custom_call.1} parent=1 // pred_check_branch
      %30 = sbr.rel (0) target = $region13
    $region12: #{tpu_custom_call.1} parent=1 // pred_region
      %31 = dma.done [#allocation7], 128
    $region13: #{tpu_custom_call.1} parent=1 // pred_fallthru
      _
    // Predicated region
    $region14: #{tpu_custom_call.1} parent=1 // pred_check
      _
    $region15: #{tpu_custom_call.1} parent=1 // pred_check_branch
      %33 = sbr.rel (0) target = $region17
    $region16: #{tpu_custom_call.1} parent=1 // pred_region
      %34 = dma.done [#allocation9], 128
    $region17: #{tpu_custom_call.1} parent=1 // pred_fallthru
      _
    %p35 = scmp.eq.s32.totalorder 0, 0
    // Predicated region
    $region18: #{tpu_custom_call.1} parent=1 // pred_check
      %p36 = pneg %p35
    $region19: #{tpu_custom_call.1} parent=1 // pred_check_branch
      %38 = sbr.rel (%p36) target = $region21
    $region20: #{tpu_custom_call.1} parent=1 // pred_region
      %vm39 = vcmask 7168
      %40 = vst.msk [vmem:[#allocation2] sm:$0xff] %vm39, 0.0
      %41 = vst.msk [vmem:[#allocation3] sm:$0xff] %vm39, 0.0
      %42 = vst.msk [vmem:[#allocation4] sm:$0xff] %vm39, 0.0
      %43 = vst.msk [vmem:[#allocation5] sm:$0xff] %vm39, 0.0
    $region21: #{tpu_custom_call.1} parent=1 // pred_fallthru
      _
    %v44 = vld [vmem:[#allocation6] sm:$0xff]
    %v45 = vld [vmem:[#allocation8] sm:$0xff]
    %v46 = vsub.f32 %v44, %v45
    %v47 = vld [vmem:[#allocation2] sm:$0xff]
    %48 = vadd.xlane.f32.xlu0 %v44
    %v49 = vpop.xlane.xlu0 %48
    %v50 = vadd.f32 %v47, %v49
    %vm51 = vcmask 7168
    %52 = vst.msk [vmem:[#allocation2] sm:$0xff] %vm51, %v50
    %v53 = vld [vmem:[#allocation3] sm:$0xff]
    %54 = vadd.xlane.f32.xlu0 %v45
    %v55 = vpop.xlane.xlu0 %54
    %v56 = vadd.f32 %v53, %v55
    %57 = vst.msk [vmem:[#allocation3] sm:$0xff] %vm51, %v56
    %v58 = vld [vmem:[#allocation4] sm:$0xff]
    %v59 = vmul.f32 %v45, %v45
    %60 = vadd.xlane.f32.xlu0 %v59
    %v61 = vpop.xlane.xlu0 %60
    %v62 = vadd.f32 %v58, %v61
    %63 = vst.msk [vmem:[#allocation4] sm:$0xff] %vm51, %v62
    %v64 = vld [vmem:[#allocation5] sm:$0xff]
    %v65 = vmul.f32 %v46, %v46
    %66 = vadd.xlane.f32.xlu0 %v65
    %v67 = vpop.xlane.xlu0 %66
    %v68 = vadd.f32 %v64, %v67
    %69 = vst.msk [vmem:[#allocation5] sm:$0xff] %vm51, %v68
    // Predicated region
    $region22: #{tpu_custom_call.1} parent=1 // pred_check
      %p70 = pneg %p35
    $region23: #{tpu_custom_call.1} parent=1 // pred_check_branch
      %72 = sbr.rel (%p70) target = $region25
    $region24: #{tpu_custom_call.1} parent=1 // pred_region
      %v73 = vld [vmem:[#allocation4] sm:$0xff]
      %v74 = vld [vmem:[#allocation5] sm:$0xff]
      %v75 = vld [vmem:[#allocation2] sm:$0xff]
      %v76 = vmul.f32 %v75, 0.0078125
      %v77 = vld [vmem:[#allocation3] sm:$0xff]
      %v78 = vmul.f32 %v77, 0.0078125
      %v79 = vsub.f32 %v76, %v78
      %v80 = vmul.f32 %v78, 128.0
      %v81 = vmul.f32 %v80, %v78
      %v82 = vsub.f32 %v73, %v81
      %v83 = vmul.f32 %v79, 128.0
      %v84 = vmul.f32 %v83, %v79
      %v85 = vsub.f32 %v74, %v84
      %v86 = vadd.f32 %v85, 1e-08
      %v87 = vrcp.pop %v86
      %v88 = vmul.f32 %v82, %v87
      %v89 = vadd.f32 %v88, 1e-08
      %v90 = vlog2.pop %v89
      %v91 = vmul.f32 %v90, 0.6931472
      %v92 = vmul.f32 %v91, 0.4342945
      %v93 = vmul.f32 %v92, 10.0
      %v94 = vsub.f32 0.0, %v93
      %95 = vst.msk [vmem:[%s2] sm:$0xff] %vm51, %v94
    $region25: #{tpu_custom_call.1} parent=1 // pred_fallthru
      _
    // Predicated region
    $region26: #{tpu_custom_call.1} parent=1 // pred_check
      _
    $region27: #{tpu_custom_call.1} parent=1 // pred_check_branch
      %97 = sbr.rel (0) target = $region29
    $region28: #{tpu_custom_call.1} parent=1 // pred_region
      _
    $region29: #{tpu_custom_call.1} parent=1 // pred_fallthru
      _
    // Predicated region
    $region30: #{tpu_custom_call.1} parent=1 // pred_check
      _
    $region31: #{tpu_custom_call.1} parent=1 // pred_check_branch
      %99 = sbr.rel (0) target = $region33
    $region32: #{tpu_custom_call.1} parent=1 // pred_region
      _
    $region33: #{tpu_custom_call.1} parent=1 // pred_fallthru
      _
    %100 = vsyncpa [#allocation7], 1
    %101 = vsyncpa [#allocation9], 1

</llo_original>
